<compile_context>
chip_gen: v5e
topology: v5e:2x2
jax: 0.10.0
libtpu: 0.0.40
codegen_flags: <defaults>
</compile_context>

<pallas_src>
import math
import numpy as np
import jax
import jax.numpy as jnp
from jax import lax
from jax.experimental import pallas as pl
from jax.experimental.pallas import tpu as pltpu

B, T, D, H, FF = 2, 8, 32, 4, 64
DK = D // H
BT = B * T
EPS = 1e-6
NEG_INF = -1e9

# Packed (8, 128) parameter-vector slab rows.
ROW_BQKV, ROW_BO, ROW_B1, ROW_B2, ROW_GN, ROW_BN, ROW_GS, ROW_BS = range(8)
VEC_LANES = 128

# Packed (D, 256) weight slab column offsets: [ wqkv | wo | w1 | w2ᵀ ]
C_QKV = 0                    # width 3*D = 96
C_WO = C_QKV + 3 * D         # width D   = 32
C_W1 = C_WO + D              # width FF  = 64
C_W2T = C_W1 + FF            # width FF  = 64
WSLAB_LANES = C_W2T + FF     # 256 lanes total (2 x 128, lane-dense)


def _layernorm(v, gamma, beta):
    # annotated-transformer LayerNorm: a_2 * (x - mean) / (std + eps) + b_2, unbiased std
    mean = jnp.mean(v, axis=-1, keepdims=True)
    c = v - mean
    var = jnp.sum(c * c, axis=-1, keepdims=True) * (1.0 / (v.shape[-1] - 1))
    inv = pl.reciprocal(jnp.sqrt(var) + EPS, approx=True)
    return gamma * c * inv + beta


def refiner_kernel(x_ref, keep_ref, wslab_ref, vec_ref, out_ref, attn_ref):
    x = x_ref[...]                                     # (BT, D)  batch folded into rows
    keep = keep_ref[...] > 0.0                         # (BT, BT) block-diag batch + key-pad mask

    bqkv = vec_ref[ROW_BQKV:ROW_BQKV + 1, 0:3 * D]     # (1, 3D)
    bo = vec_ref[ROW_BO:ROW_BO + 1, 0:D]
    b1 = vec_ref[ROW_B1:ROW_B1 + 1, 0:FF]
    b2 = vec_ref[ROW_B2:ROW_B2 + 1, 0:D]
    gn = vec_ref[ROW_GN:ROW_GN + 1, 0:D]
    bn = vec_ref[ROW_BN:ROW_BN + 1, 0:D]
    gs = vec_ref[ROW_GS:ROW_GS + 1, 0:D]
    bs = vec_ref[ROW_BS:ROW_BS + 1, 0:D]

    wqkv = wslab_ref[:, C_QKV:C_QKV + 3 * D]           # (D, 3D)
    w1 = wslab_ref[:, C_W1:C_W1 + FF]                  # (D, FF)
    w2t = wslab_ref[:, C_W2T:C_W2T + FF]               # (D, FF) == w2.T

    # Fused q/k/v projection: one (BT, D) @ (D, 3D) matmul.
    qkv = jnp.dot(x, wqkv, preferred_element_type=jnp.float32) + bqkv
    q = qkv[:, 0:D] * (1.0 / math.sqrt(DK))            # fold the 1/sqrt(dk) score scale into q
    k = qkv[:, D:2 * D]
    v = qkv[:, 2 * D:3 * D]

    # Per-head attention on a single (BT, BT) score matrix; cross-batch entries get -1e9, so
    # exp() underflows to exactly 0 in f32 and the softmax matches the per-batch
    # masked_fill(-1e9) + softmax of the reference.
    # TODO(synk): an all-padding sequence (every key masked) would make its rows uniform over
    # all BT keys instead of its own T keys; not exercised by the module's usage.
    x_temp = jnp.zeros((BT, D), jnp.float32)           # per-head output-projection accumulator
    for h in range(H):                                 # static unroll over heads
        sl = slice(h * DK, (h + 1) * DK)
        s = lax.dot_general(q[:, sl], k[:, sl], (((1,), (1,)), ((), ())),
                            preferred_element_type=jnp.float32)        # (BT, BT)
        s = jnp.where(keep, s, NEG_INF)
        s = s - jnp.max(s, axis=-1, keepdims=True)
        e = jnp.exp(s)
        p = e * pl.reciprocal(jnp.sum(e, axis=-1, keepdims=True), approx=True)

        attn_ref[h, :, :] = p                          # full-tile store; block-diag sliced in wrapper

        ctx_h = jnp.dot(p, v[:, sl], preferred_element_type=jnp.float32)       # (BT, DK)
        wo_h = wslab_ref[sl, C_WO:C_WO + D]                                     # (DK, D)
        x_temp = x_temp + jnp.dot(ctx_h, wo_h, preferred_element_type=jnp.float32)

    # Residual + norm after the attention sublayer.
    x1 = _layernorm(x + x_temp + bo, gn, bn)           # norm(x + dropout(x_temp)); dropout = id

    # sublayer(x1, feed_forward) = x1 + ff(sublayer.norm(x1)), then self.norm again.
    h0 = _layernorm(x1, gs, bs)
    h1 = jnp.maximum(jnp.dot(h0, w1, preferred_element_type=jnp.float32) + b1, 0.0)
    ffo = lax.dot_general(h1, w2t, (((1,), (1,)), ((), ())),
                          preferred_element_type=jnp.float32) + b2
    out_ref[...] = _layernorm(x1 + ffo, gn, bn)


def prepare_params(p):
    """Fold the 18 small parameter tensors into 2 TPU-friendly slabs (call once)."""
    wqkv = jnp.concatenate([p["wq"], p["wk"], p["wv"]], axis=1)                 # (D, 3D)
    wslab = jnp.concatenate([wqkv, p["wo"], p["w1"], p["w2"].T], axis=1)        # (D, 256)
    vec_rows = [
        jnp.concatenate([p["bq"], p["bk"], p["bv"]], axis=1),                   # (1, 3D)
        p["bo"], p["b1"], p["b2"], p["gn"], p["bn"], p["gs"], p["bs"],
    ]
    vecs = jnp.zeros((8, VEC_LANES), jnp.float32)
    for i, r in enumerate(vec_rows):
        vecs = vecs.at[i, :r.shape[1]].set(r[0])
    return {"wslab": wslab, "vecs": vecs}


def refiner_layer(x, mask, packed):
    x2d = x.reshape(BT, D)                 # fold batch into rows (wrapper-side, free)

    # Precompute the (BT, BT) keep mask: same-batch AND key-not-padding.
    batch_id = jnp.arange(BT, dtype=jnp.int32) // T
    mask_keys = mask.reshape(BT)
    keep = ((batch_id[:, None] == batch_id[None, :]) & (mask_keys[None, :] > 0)
            ).astype(jnp.float32)

    full = lambda shape: pl.BlockSpec(shape, lambda i: (0,) * len(shape))

    out2d, attn_full = pl.pallas_call(
        refiner_kernel,
        grid=(1,),                         # whole problem in a single grid step
        in_specs=[
            full((BT, D)),                 # x
            full((BT, BT)),                # keep mask
            full((D, WSLAB_LANES)),        # packed weights: wqkv | wo | w1 | w2ᵀ
            full((8, VEC_LANES)),          # packed biases + layernorm gamma/beta
        ],
        out_specs=(
            full((BT, D)),
            full((H, BT, BT)),
        ),
        out_shape=(
            jax.ShapeDtypeStruct((BT, D), jnp.float32),
            jax.ShapeDtypeStruct((H, BT, BT), jnp.float32),
        ),
        compiler_params=pltpu.CompilerParams(dimension_semantics=("arbitrary",)),
    )(x2d, keep, packed["wslab"], packed["vecs"])

    # Extract the per-batch (T, T) diagonal blocks in the wrapper (cross-batch blocks are 0).
    attn = jnp.stack(
        [attn_full[:, b * T:(b + 1) * T, b * T:(b + 1) * T] for b in range(B)], axis=0
    )                                      # (B, H, T, T)
    return out2d.reshape(B, T, D), attn


def ref_forward(x, mask, p):
    def ln(v, g, b):
        mean = jnp.mean(v, axis=-1, keepdims=True)
        var = jnp.sum((v - mean) ** 2, axis=-1, keepdims=True) / (v.shape[-1] - 1)
        return g * (v - mean) / (jnp.sqrt(var) + EPS) + b

    q = x @ p["wq"] + p["bq"]
    k = x @ p["wk"] + p["bk"]
    v = x @ p["wv"] + p["bv"]
    qh = q.reshape(B, T, H, DK).transpose(0, 2, 1, 3)
    kh = k.reshape(B, T, H, DK).transpose(0, 2, 1, 3)
    vh = v.reshape(B, T, H, DK).transpose(0, 2, 1, 3)
    s = jnp.einsum("bhtd,bhsd->bhts", qh, kh) / math.sqrt(DK)
    s = jnp.where(mask[:, :, None, :] > 0, s, -1e9)
    s = s - jnp.max(s, axis=-1, keepdims=True)
    e = jnp.exp(s)
    attn = e / jnp.sum(e, axis=-1, keepdims=True)
    ctx = jnp.einsum("bhts,bhsd->bhtd", attn, vh).transpose(0, 2, 1, 3).reshape(B, T, D)
    x_temp = ctx @ p["wo"] + p["bo"]
    x1 = ln(x + x_temp, p["gn"], p["bn"])
    h0 = ln(x1, p["gs"], p["bs"])
    ffo = jnp.maximum(h0 @ p["w1"] + p["b1"], 0.0) @ p["w2"] + p["b2"]
    out = ln(x1 + ffo, p["gn"], p["bn"])
    return out, attn


def init_params(key):
    keys = jax.random.split(key, 8)
    p = {
        "wq": jax.random.normal(keys[0], (D, D), jnp.float32) * 0.1,
        "bq": jax.random.normal(keys[1], (1, D), jnp.float32) * 0.01,
        "wk": jax.random.normal(keys[2], (D, D), jnp.float32) * 0.1,
        "bk": jnp.zeros((1, D), jnp.float32),
        "wv": jax.random.normal(keys[3], (D, D), jnp.float32) * 0.1,
        "bv": jnp.zeros((1, D), jnp.float32),
        "wo": jax.random.normal(keys[4], (D, D), jnp.float32) * 0.1,
        "bo": jax.random.normal(keys[5], (1, D), jnp.float32) * 0.01,
        "w1": jax.random.normal(keys[6], (D, FF), jnp.float32) * 0.1,
        "b1": jnp.zeros((1, FF), jnp.float32),
        "w2": jax.random.normal(keys[7], (FF, D), jnp.float32) * 0.1,
        "b2": jnp.zeros((1, D), jnp.float32),
        "gn": jnp.ones((1, D), jnp.float32),
        "bn": jnp.zeros((1, D), jnp.float32),
        "gs": jnp.ones((1, D), jnp.float32),
        "bs": jnp.zeros((1, D), jnp.float32),
    }
    return p


if __name__ == "__main__":
    key = jax.random.PRNGKey(0)
    kx, kp = jax.random.split(key)
    x = jax.random.normal(kx, (B, T, D), jnp.float32)
    # mask: [B, 1, T]; last token of batch 1 is padding
    mask = jnp.ones((B, 1, T), jnp.float32).at[1, 0, T - 1].set(0.0)
    params = init_params(kp)
    packed = prepare_params(params)

    out, verb_attn = refiner_layer(x, mask, packed)
    out = jax.block_until_ready(out)
    verb_attn = jax.block_until_ready(verb_attn)

    out_ref, attn_ref = ref_forward(x, mask, params)
    assert np.allclose(np.asarray(out), np.asarray(out_ref), atol=1e-2, rtol=1e-2)
    assert np.allclose(np.asarray(verb_attn), np.asarray(attn_ref), atol=1e-2, rtol=1e-2)

    print("KERNEL_OK")
</pallas_src>

<mosaic_0001>
module attributes {stable_mosaic.version = 11 : i64} {
  func.func @refiner_kernel(%arg0: i32, %arg1: memref<16x32xf32, #tpu.memory_space<vmem>>, %arg2: memref<16x16xf32, #tpu.memory_space<vmem>>, %arg3: memref<32x256xf32, #tpu.memory_space<vmem>>, %arg4: memref<8x128xf32, #tpu.memory_space<vmem>>, %arg5: memref<16x32xf32, #tpu.memory_space<vmem>>, %arg6: memref<4x16x16xf32, #tpu.memory_space<vmem>>) attributes {dimension_semantics = [#tpu.dimension_semantics<arbitrary>], iteration_bounds = array<i64: 1>, scalar_prefetch = 0 : i64, scratch_operands = 0 : i64, tpu.core_type = #tpu.core_type<tc>, window_params = [{pipeline_mode = #tpu.pipeline_mode<synchronous>, transform_indices = @transform_0, window_bounds = array<i64: 16, 32>}, {pipeline_mode = #tpu.pipeline_mode<synchronous>, transform_indices = @transform_1, window_bounds = array<i64: 16, 16>}, {pipeline_mode = #tpu.pipeline_mode<synchronous>, transform_indices = @transform_2, window_bounds = array<i64: 32, 256>}, {pipeline_mode = #tpu.pipeline_mode<synchronous>, transform_indices = @transform_3, window_bounds = array<i64: 8, 128>}, {pipeline_mode = #tpu.pipeline_mode<synchronous>, transform_indices = @transform_4, window_bounds = array<i64: 16, 32>}, {pipeline_mode = #tpu.pipeline_mode<synchronous>, transform_indices = @transform_5, window_bounds = array<i64: 4, 16, 16>}]} {
    %c0 = arith.constant 0 : index
    %c0_0 = arith.constant 0 : index
    %0 = vector.load %arg1[%c0, %c0_0] : memref<16x32xf32, #tpu.memory_space<vmem>>, vector<16x32xf32>
    %c0_1 = arith.constant 0 : index
    %c0_2 = arith.constant 0 : index
    %1 = vector.load %arg2[%c0_1, %c0_2] : memref<16x16xf32, #tpu.memory_space<vmem>>, vector<16x16xf32>
    %cst = arith.constant 0.000000e+00 : f32
    %2 = vector.broadcast %cst : f32 to vector<16x16xf32>
    %3 = arith.cmpf ogt, %1, %2 : vector<16x16xf32>
    %c0_3 = arith.constant 0 : index
    %c0_4 = arith.constant 0 : index
    %4 = vector.load %arg4[%c0_3, %c0_4] : memref<8x128xf32, #tpu.memory_space<vmem>>, vector<1x96xf32>
    %c1 = arith.constant 1 : index
    %c0_5 = arith.constant 0 : index
    %5 = vector.load %arg4[%c1, %c0_5] : memref<8x128xf32, #tpu.memory_space<vmem>>, vector<1x32xf32>
    %c2 = arith.constant 2 : index
    %c0_6 = arith.constant 0 : index
    %6 = vector.load %arg4[%c2, %c0_6] : memref<8x128xf32, #tpu.memory_space<vmem>>, vector<1x64xf32>
    %c3 = arith.constant 3 : index
    %c0_7 = arith.constant 0 : index
    %7 = vector.load %arg4[%c3, %c0_7] : memref<8x128xf32, #tpu.memory_space<vmem>>, vector<1x32xf32>
    %c4 = arith.constant 4 : index
    %c0_8 = arith.constant 0 : index
    %8 = vector.load %arg4[%c4, %c0_8] : memref<8x128xf32, #tpu.memory_space<vmem>>, vector<1x32xf32>
    %c5 = arith.constant 5 : index
    %c0_9 = arith.constant 0 : index
    %9 = vector.load %arg4[%c5, %c0_9] : memref<8x128xf32, #tpu.memory_space<vmem>>, vector<1x32xf32>
    %c6 = arith.constant 6 : index
    %c0_10 = arith.constant 0 : index
    %10 = vector.load %arg4[%c6, %c0_10] : memref<8x128xf32, #tpu.memory_space<vmem>>, vector<1x32xf32>
    %c7 = arith.constant 7 : index
    %c0_11 = arith.constant 0 : index
    %11 = vector.load %arg4[%c7, %c0_11] : memref<8x128xf32, #tpu.memory_space<vmem>>, vector<1x32xf32>
    %c0_12 = arith.constant 0 : index
    %c0_13 = arith.constant 0 : index
    %12 = vector.load %arg3[%c0_12, %c0_13] : memref<32x256xf32, #tpu.memory_space<vmem>>, vector<32x96xf32>
    %c0_14 = arith.constant 0 : index
    %c128 = arith.constant 128 : index
    %13 = vector.load %arg3[%c0_14, %c128] : memref<32x256xf32, #tpu.memory_space<vmem>>, vector<32x64xf32>
    %c0_15 = arith.constant 0 : index
    %c192 = arith.constant 192 : index
    %14 = vector.load %arg3[%c0_15, %c192] : memref<32x256xf32, #tpu.memory_space<vmem>>, vector<32x64xf32>
    %cst_16 = arith.constant dense<0.000000e+00> : vector<16x96xf32>
    %15 = tpu.matmul %0, %12, %cst_16 {dimension_numbers = #tpu.dot_dimension_numbers<[1], [0], [0], [1], [0, 0, 1, 1], [], []>} : vector<16x32xf32>, vector<32x96xf32>, vector<16x96xf32> -> vector<16x96xf32>
    %16 = vector.broadcast %4 : vector<1x96xf32> to vector<16x96xf32>
    %17 = arith.addf %15, %16 : vector<16x96xf32>
    %18 = vector.extract_strided_slice %17 {offsets = [0, 0], sizes = [16, 32], strides = [1, 1]} : vector<16x96xf32> to vector<16x32xf32>
    %cst_17 = arith.constant 0.353553385 : f32
    %19 = vector.broadcast %cst_17 : f32 to vector<16x32xf32>
    %20 = arith.mulf %18, %19 : vector<16x32xf32>
    %21 = vector.extract_strided_slice %17 {offsets = [0, 32], sizes = [16, 32], strides = [1, 1]} : vector<16x96xf32> to vector<16x32xf32>
    %22 = vector.extract_strided_slice %17 {offsets = [0, 64], sizes = [16, 32], strides = [1, 1]} : vector<16x96xf32> to vector<16x32xf32>
    %cst_18 = arith.constant 0.000000e+00 : f32
    %23 = vector.broadcast %cst_18 : f32 to vector<16x32xf32>
    %24 = vector.extract_strided_slice %20 {offsets = [0, 0], sizes = [16, 8], strides = [1, 1]} : vector<16x32xf32> to vector<16x8xf32>
    %25 = vector.extract_strided_slice %21 {offsets = [0, 0], sizes = [16, 8], strides = [1, 1]} : vector<16x32xf32> to vector<16x8xf32>
    %cst_19 = arith.constant dense<0.000000e+00> : vector<16x16xf32>
    %26 = tpu.matmul %24, %25, %cst_19 {dimension_numbers = #tpu.dot_dimension_numbers<[1], [1], [0], [0], [0, 0, 1, 0], [], []>} : vector<16x8xf32>, vector<16x8xf32>, vector<16x16xf32> -> vector<16x16xf32>
    %cst_20 = arith.constant -1.000000e+09 : f32
    %27 = vector.broadcast %cst_20 : f32 to vector<16x16xf32>
    %28 = arith.select %3, %26, %27 : vector<16x16xi1>, vector<16x16xf32>
    %cst_21 = arith.constant dense<0xFF800000> : vector<16xf32>
    %29 = vector.multi_reduction <maximumf>, %28, %cst_21 [1] : vector<16x16xf32> to vector<16xf32>
    %30 = vector.shape_cast %29 : vector<16xf32> to vector<16x1xf32>
    %31 = vector.broadcast %30 : vector<16x1xf32> to vector<16x16xf32>
    %32 = arith.subf %28, %31 : vector<16x16xf32>
    %33 = math.exp %32 : vector<16x16xf32>
    %cst_22 = arith.constant dense<0.000000e+00> : vector<16xf32>
    %34 = vector.multi_reduction <add>, %33, %cst_22 [1] : vector<16x16xf32> to vector<16xf32>
    %35 = vector.shape_cast %34 : vector<16xf32> to vector<16x1xf32>
    %36 = tpu.reciprocal %35 {approx = true} : vector<16x1xf32> -> vector<16x1xf32>
    %37 = vector.broadcast %36 : vector<16x1xf32> to vector<16x16xf32>
    %38 = arith.mulf %33, %37 : vector<16x16xf32>
    %c0_23 = arith.constant 0 : index
    %c0_24 = arith.constant 0 : index
    %c0_25 = arith.constant 0 : index
    %39 = vector.load %arg6[%c0_23, %c0_24, %c0_25] : memref<4x16x16xf32, #tpu.memory_space<vmem>>, vector<1x16x16xf32>
    %40 = vector.shape_cast %39 : vector<1x16x16xf32> to vector<16x16xf32>
    %41 = vector.shape_cast %38 : vector<16x16xf32> to vector<1x16x16xf32>
    tpu.vector_store %arg6[%c0_23, %c0_24, %c0_25], %41 {strides = array<i32>} : memref<4x16x16xf32, #tpu.memory_space<vmem>>, vector<1x16x16xf32>,
    %42 = vector.extract_strided_slice %22 {offsets = [0, 0], sizes = [16, 8], strides = [1, 1]} : vector<16x32xf32> to vector<16x8xf32>
    %cst_26 = arith.constant dense<0.000000e+00> : vector<16x8xf32>
    %43 = tpu.matmul %38, %42, %cst_26 {dimension_numbers = #tpu.dot_dimension_numbers<[1], [0], [0], [1], [0, 0, 1, 1], [], []>} : vector<16x16xf32>, vector<16x8xf32>, vector<16x8xf32> -> vector<16x8xf32>
    %c0_27 = arith.constant 0 : index
    %c96 = arith.constant 96 : index
    %44 = vector.load %arg3[%c0_27, %c96] : memref<32x256xf32, #tpu.memory_space<vmem>>, vector<8x32xf32>
    %cst_28 = arith.constant dense<0.000000e+00> : vector<16x32xf32>
    %45 = tpu.matmul %43, %44, %cst_28 {dimension_numbers = #tpu.dot_dimension_numbers<[1], [0], [0], [1], [0, 0, 1, 1], [], []>} : vector<16x8xf32>, vector<8x32xf32>, vector<16x32xf32> -> vector<16x32xf32>
    %46 = arith.addf %23, %45 : vector<16x32xf32>
    %47 = vector.extract_strided_slice %20 {offsets = [0, 8], sizes = [16, 8], strides = [1, 1]} : vector<16x32xf32> to vector<16x8xf32>
    %48 = vector.extract_strided_slice %21 {offsets = [0, 8], sizes = [16, 8], strides = [1, 1]} : vector<16x32xf32> to vector<16x8xf32>
    %cst_29 = arith.constant dense<0.000000e+00> : vector<16x16xf32>
    %49 = tpu.matmul %47, %48, %cst_29 {dimension_numbers = #tpu.dot_dimension_numbers<[1], [1], [0], [0], [0, 0, 1, 0], [], []>} : vector<16x8xf32>, vector<16x8xf32>, vector<16x16xf32> -> vector<16x16xf32>
    %cst_30 = arith.constant -1.000000e+09 : f32
    %50 = vector.broadcast %cst_30 : f32 to vector<16x16xf32>
    %51 = arith.select %3, %49, %50 : vector<16x16xi1>, vector<16x16xf32>
    %cst_31 = arith.constant dense<0xFF800000> : vector<16xf32>
    %52 = vector.multi_reduction <maximumf>, %51, %cst_31 [1] : vector<16x16xf32> to vector<16xf32>
    %53 = vector.shape_cast %52 : vector<16xf32> to vector<16x1xf32>
    %54 = vector.broadcast %53 : vector<16x1xf32> to vector<16x16xf32>
    %55 = arith.subf %51, %54 : vector<16x16xf32>
    %56 = math.exp %55 : vector<16x16xf32>
    %cst_32 = arith.constant dense<0.000000e+00> : vector<16xf32>
    %57 = vector.multi_reduction <add>, %56, %cst_32 [1] : vector<16x16xf32> to vector<16xf32>
    %58 = vector.shape_cast %57 : vector<16xf32> to vector<16x1xf32>
    %59 = tpu.reciprocal %58 {approx = true} : vector<16x1xf32> -> vector<16x1xf32>
    %60 = vector.broadcast %59 : vector<16x1xf32> to vector<16x16xf32>
    %61 = arith.mulf %56, %60 : vector<16x16xf32>
    %c1_33 = arith.constant 1 : index
    %c0_34 = arith.constant 0 : index
    %c0_35 = arith.constant 0 : index
    %62 = vector.load %arg6[%c1_33, %c0_34, %c0_35] : memref<4x16x16xf32, #tpu.memory_space<vmem>>, vector<1x16x16xf32>
    %63 = vector.shape_cast %62 : vector<1x16x16xf32> to vector<16x16xf32>
    %64 = vector.shape_cast %61 : vector<16x16xf32> to vector<1x16x16xf32>
    tpu.vector_store %arg6[%c1_33, %c0_34, %c0_35], %64 {strides = array<i32>} : memref<4x16x16xf32, #tpu.memory_space<vmem>>, vector<1x16x16xf32>,
    %65 = vector.extract_strided_slice %22 {offsets = [0, 8], sizes = [16, 8], strides = [1, 1]} : vector<16x32xf32> to vector<16x8xf32>
    %cst_36 = arith.constant dense<0.000000e+00> : vector<16x8xf32>
    %66 = tpu.matmul %61, %65, %cst_36 {dimension_numbers = #tpu.dot_dimension_numbers<[1], [0], [0], [1], [0, 0, 1, 1], [], []>} : vector<16x16xf32>, vector<16x8xf32>, vector<16x8xf32> -> vector<16x8xf32>
    %c8 = arith.constant 8 : index
    %c96_37 = arith.constant 96 : index
    %67 = vector.load %arg3[%c8, %c96_37] : memref<32x256xf32, #tpu.memory_space<vmem>>, vector<8x32xf32>
    %cst_38 = arith.constant dense<0.000000e+00> : vector<16x32xf32>
    %68 = tpu.matmul %66, %67, %cst_38 {dimension_numbers = #tpu.dot_dimension_numbers<[1], [0], [0], [1], [0, 0, 1, 1], [], []>} : vector<16x8xf32>, vector<8x32xf32>, vector<16x32xf32> -> vector<16x32xf32>
    %69 = arith.addf %46, %68 : vector<16x32xf32>
    %70 = vector.extract_strided_slice %20 {offsets = [0, 16], sizes = [16, 8], strides = [1, 1]} : vector<16x32xf32> to vector<16x8xf32>
    %71 = vector.extract_strided_slice %21 {offsets = [0, 16], sizes = [16, 8], strides = [1, 1]} : vector<16x32xf32> to vector<16x8xf32>
    %cst_39 = arith.constant dense<0.000000e+00> : vector<16x16xf32>
    %72 = tpu.matmul %70, %71, %cst_39 {dimension_numbers = #tpu.dot_dimension_numbers<[1], [1], [0], [0], [0, 0, 1, 0], [], []>} : vector<16x8xf32>, vector<16x8xf32>, vector<16x16xf32> -> vector<16x16xf32>
    %cst_40 = arith.constant -1.000000e+09 : f32
    %73 = vector.broadcast %cst_40 : f32 to vector<16x16xf32>
    %74 = arith.select %3, %72, %73 : vector<16x16xi1>, vector<16x16xf32>
    %cst_41 = arith.constant dense<0xFF800000> : vector<16xf32>
    %75 = vector.multi_reduction <maximumf>, %74, %cst_41 [1] : vector<16x16xf32> to vector<16xf32>
    %76 = vector.shape_cast %75 : vector<16xf32> to vector<16x1xf32>
    %77 = vector.broadcast %76 : vector<16x1xf32> to vector<16x16xf32>
    %78 = arith.subf %74, %77 : vector<16x16xf32>
    %79 = math.exp %78 : vector<16x16xf32>
    %cst_42 = arith.constant dense<0.000000e+00> : vector<16xf32>
    %80 = vector.multi_reduction <add>, %79, %cst_42 [1] : vector<16x16xf32> to vector<16xf32>
    %81 = vector.shape_cast %80 : vector<16xf32> to vector<16x1xf32>
    %82 = tpu.reciprocal %81 {approx = true} : vector<16x1xf32> -> vector<16x1xf32>
    %83 = vector.broadcast %82 : vector<16x1xf32> to vector<16x16xf32>
    %84 = arith.mulf %79, %83 : vector<16x16xf32>
    %c2_43 = arith.constant 2 : index
    %c0_44 = arith.constant 0 : index
    %c0_45 = arith.constant 0 : index
    %85 = vector.load %arg6[%c2_43, %c0_44, %c0_45] : memref<4x16x16xf32, #tpu.memory_space<vmem>>, vector<1x16x16xf32>
    %86 = vector.shape_cast %85 : vector<1x16x16xf32> to vector<16x16xf32>
    %87 = vector.shape_cast %84 : vector<16x16xf32> to vector<1x16x16xf32>
    tpu.vector_store %arg6[%c2_43, %c0_44, %c0_45], %87 {strides = array<i32>} : memref<4x16x16xf32, #tpu.memory_space<vmem>>, vector<1x16x16xf32>,
    %88 = vector.extract_strided_slice %22 {offsets = [0, 16], sizes = [16, 8], strides = [1, 1]} : vector<16x32xf32> to vector<16x8xf32>
    %cst_46 = arith.constant dense<0.000000e+00> : vector<16x8xf32>
    %89 = tpu.matmul %84, %88, %cst_46 {dimension_numbers = #tpu.dot_dimension_numbers<[1], [0], [0], [1], [0, 0, 1, 1], [], []>} : vector<16x16xf32>, vector<16x8xf32>, vector<16x8xf32> -> vector<16x8xf32>
    %c16 = arith.constant 16 : index
    %c96_47 = arith.constant 96 : index
    %90 = vector.load %arg3[%c16, %c96_47] : memref<32x256xf32, #tpu.memory_space<vmem>>, vector<8x32xf32>
    %cst_48 = arith.constant dense<0.000000e+00> : vector<16x32xf32>
    %91 = tpu.matmul %89, %90, %cst_48 {dimension_numbers = #tpu.dot_dimension_numbers<[1], [0], [0], [1], [0, 0, 1, 1], [], []>} : vector<16x8xf32>, vector<8x32xf32>, vector<16x32xf32> -> vector<16x32xf32>
    %92 = arith.addf %69, %91 : vector<16x32xf32>
    %93 = vector.extract_strided_slice %20 {offsets = [0, 24], sizes = [16, 8], strides = [1, 1]} : vector<16x32xf32> to vector<16x8xf32>
    %94 = vector.extract_strided_slice %21 {offsets = [0, 24], sizes = [16, 8], strides = [1, 1]} : vector<16x32xf32> to vector<16x8xf32>
    %cst_49 = arith.constant dense<0.000000e+00> : vector<16x16xf32>
    %95 = tpu.matmul %93, %94, %cst_49 {dimension_numbers = #tpu.dot_dimension_numbers<[1], [1], [0], [0], [0, 0, 1, 0], [], []>} : vector<16x8xf32>, vector<16x8xf32>, vector<16x16xf32> -> vector<16x16xf32>
    %cst_50 = arith.constant -1.000000e+09 : f32
    %96 = vector.broadcast %cst_50 : f32 to vector<16x16xf32>
    %97 = arith.select %3, %95, %96 : vector<16x16xi1>, vector<16x16xf32>
    %cst_51 = arith.constant dense<0xFF800000> : vector<16xf32>
    %98 = vector.multi_reduction <maximumf>, %97, %cst_51 [1] : vector<16x16xf32> to vector<16xf32>
    %99 = vector.shape_cast %98 : vector<16xf32> to vector<16x1xf32>
    %100 = vector.broadcast %99 : vector<16x1xf32> to vector<16x16xf32>
    %101 = arith.subf %97, %100 : vector<16x16xf32>
    %102 = math.exp %101 : vector<16x16xf32>
    %cst_52 = arith.constant dense<0.000000e+00> : vector<16xf32>
    %103 = vector.multi_reduction <add>, %102, %cst_52 [1] : vector<16x16xf32> to vector<16xf32>
    %104 = vector.shape_cast %103 : vector<16xf32> to vector<16x1xf32>
    %105 = tpu.reciprocal %104 {approx = true} : vector<16x1xf32> -> vector<16x1xf32>
    %106 = vector.broadcast %105 : vector<16x1xf32> to vector<16x16xf32>
    %107 = arith.mulf %102, %106 : vector<16x16xf32>
    %c3_53 = arith.constant 3 : index
    %c0_54 = arith.constant 0 : index
    %c0_55 = arith.constant 0 : index
    %108 = vector.load %arg6[%c3_53, %c0_54, %c0_55] : memref<4x16x16xf32, #tpu.memory_space<vmem>>, vector<1x16x16xf32>
    %109 = vector.shape_cast %108 : vector<1x16x16xf32> to vector<16x16xf32>
    %110 = vector.shape_cast %107 : vector<16x16xf32> to vector<1x16x16xf32>
    tpu.vector_store %arg6[%c3_53, %c0_54, %c0_55], %110 {strides = array<i32>} : memref<4x16x16xf32, #tpu.memory_space<vmem>>, vector<1x16x16xf32>,
    %111 = vector.extract_strided_slice %22 {offsets = [0, 24], sizes = [16, 8], strides = [1, 1]} : vector<16x32xf32> to vector<16x8xf32>
    %cst_56 = arith.constant dense<0.000000e+00> : vector<16x8xf32>
    %112 = tpu.matmul %107, %111, %cst_56 {dimension_numbers = #tpu.dot_dimension_numbers<[1], [0], [0], [1], [0, 0, 1, 1], [], []>} : vector<16x16xf32>, vector<16x8xf32>, vector<16x8xf32> -> vector<16x8xf32>
    %c24 = arith.constant 24 : index
    %c96_57 = arith.constant 96 : index
    %113 = vector.load %arg3[%c24, %c96_57] : memref<32x256xf32, #tpu.memory_space<vmem>>, vector<8x32xf32>
    %cst_58 = arith.constant dense<0.000000e+00> : vector<16x32xf32>
    %114 = tpu.matmul %112, %113, %cst_58 {dimension_numbers = #tpu.dot_dimension_numbers<[1], [0], [0], [1], [0, 0, 1, 1], [], []>} : vector<16x8xf32>, vector<8x32xf32>, vector<16x32xf32> -> vector<16x32xf32>
    %115 = arith.addf %92, %114 : vector<16x32xf32>
    %116 = arith.addf %0, %115 : vector<16x32xf32>
    %117 = vector.broadcast %5 : vector<1x32xf32> to vector<16x32xf32>
    %118 = arith.addf %116, %117 : vector<16x32xf32>
    %cst_59 = arith.constant dense<0.000000e+00> : vector<16xf32>
    %119 = vector.multi_reduction <add>, %118, %cst_59 [1] : vector<16x32xf32> to vector<16xf32>
    %120 = vector.shape_cast %119 : vector<16xf32> to vector<16x1xf32>
    %cst_60 = arith.constant 3.200000e+01 : f32
    %121 = vector.broadcast %cst_60 : f32 to vector<16x1xf32>
    %122 = arith.divf %120, %121 : vector<16x1xf32>
    %123 = vector.broadcast %122 : vector<16x1xf32> to vector<16x32xf32>
    %124 = arith.subf %118, %123 : vector<16x32xf32>
    %125 = arith.mulf %124, %124 : vector<16x32xf32>
    %cst_61 = arith.constant dense<0.000000e+00> : vector<16xf32>
    %126 = vector.multi_reduction <add>, %125, %cst_61 [1] : vector<16x32xf32> to vector<16xf32>
    %127 = vector.shape_cast %126 : vector<16xf32> to vector<16x1xf32>
    %cst_62 = arith.constant 0.0322580636 : f32
    %128 = vector.broadcast %cst_62 : f32 to vector<16x1xf32>
    %129 = arith.mulf %127, %128 : vector<16x1xf32>
    %130 = math.sqrt %129 : vector<16x1xf32>
    %cst_63 = arith.constant 9.99999997E-7 : f32
    %131 = vector.broadcast %cst_63 : f32 to vector<16x1xf32>
    %132 = arith.addf %130, %131 : vector<16x1xf32>
    %133 = tpu.reciprocal %132 {approx = true} : vector<16x1xf32> -> vector<16x1xf32>
    %134 = vector.broadcast %8 : vector<1x32xf32> to vector<16x32xf32>
    %135 = arith.mulf %134, %124 : vector<16x32xf32>
    %136 = vector.broadcast %133 : vector<16x1xf32> to vector<16x32xf32>
    %137 = arith.mulf %135, %136 : vector<16x32xf32>
    %138 = vector.broadcast %9 : vector<1x32xf32> to vector<16x32xf32>
    %139 = arith.addf %137, %138 : vector<16x32xf32>
    %cst_64 = arith.constant dense<0.000000e+00> : vector<16xf32>
    %140 = vector.multi_reduction <add>, %139, %cst_64 [1] : vector<16x32xf32> to vector<16xf32>
    %141 = vector.shape_cast %140 : vector<16xf32> to vector<16x1xf32>
    %cst_65 = arith.constant 3.200000e+01 : f32
    %142 = vector.broadcast %cst_65 : f32 to vector<16x1xf32>
    %143 = arith.divf %141, %142 : vector<16x1xf32>
    %144 = vector.broadcast %143 : vector<16x1xf32> to vector<16x32xf32>
    %145 = arith.subf %139, %144 : vector<16x32xf32>
    %146 = arith.mulf %145, %145 : vector<16x32xf32>
    %cst_66 = arith.constant dense<0.000000e+00> : vector<16xf32>
    %147 = vector.multi_reduction <add>, %146, %cst_66 [1] : vector<16x32xf32> to vector<16xf32>
    %148 = vector.shape_cast %147 : vector<16xf32> to vector<16x1xf32>
    %cst_67 = arith.constant 0.0322580636 : f32
    %149 = vector.broadcast %cst_67 : f32 to vector<16x1xf32>
    %150 = arith.mulf %148, %149 : vector<16x1xf32>
    %151 = math.sqrt %150 : vector<16x1xf32>
    %cst_68 = arith.constant 9.99999997E-7 : f32
    %152 = vector.broadcast %cst_68 : f32 to vector<16x1xf32>
    %153 = arith.addf %151, %152 : vector<16x1xf32>
    %154 = tpu.reciprocal %153 {approx = true} : vector<16x1xf32> -> vector<16x1xf32>
    %155 = vector.broadcast %10 : vector<1x32xf32> to vector<16x32xf32>
    %156 = arith.mulf %155, %145 : vector<16x32xf32>
    %157 = vector.broadcast %154 : vector<16x1xf32> to vector<16x32xf32>
    %158 = arith.mulf %156, %157 : vector<16x32xf32>
    %159 = vector.broadcast %11 : vector<1x32xf32> to vector<16x32xf32>
    %160 = arith.addf %158, %159 : vector<16x32xf32>
    %cst_69 = arith.constant dense<0.000000e+00> : vector<16x64xf32>
    %161 = tpu.matmul %160, %13, %cst_69 {dimension_numbers = #tpu.dot_dimension_numbers<[1], [0], [0], [1], [0, 0, 1, 1], [], []>} : vector<16x32xf32>, vector<32x64xf32>, vector<16x64xf32> -> vector<16x64xf32>
    %162 = vector.broadcast %6 : vector<1x64xf32> to vector<16x64xf32>
    %163 = arith.addf %161, %162 : vector<16x64xf32>
    %cst_70 = arith.constant 0.000000e+00 : f32
    %164 = vector.broadcast %cst_70 : f32 to vector<16x64xf32>
    %165 = arith.maximumf %163, %164 : vector<16x64xf32>
    %cst_71 = arith.constant dense<0.000000e+00> : vector<16x32xf32>
    %166 = tpu.matmul %165, %14, %cst_71 {dimension_numbers = #tpu.dot_dimension_numbers<[1], [1], [0], [0], [0, 0, 1, 0], [], []>} : vector<16x64xf32>, vector<32x64xf32>, vector<16x32xf32> -> vector<16x32xf32>
    %167 = vector.broadcast %7 : vector<1x32xf32> to vector<16x32xf32>
    %168 = arith.addf %166, %167 : vector<16x32xf32>
    %169 = arith.addf %139, %168 : vector<16x32xf32>
    %cst_72 = arith.constant dense<0.000000e+00> : vector<16xf32>
    %170 = vector.multi_reduction <add>, %169, %cst_72 [1] : vector<16x32xf32> to vector<16xf32>
    %171 = vector.shape_cast %170 : vector<16xf32> to vector<16x1xf32>
    %cst_73 = arith.constant 3.200000e+01 : f32
    %172 = vector.broadcast %cst_73 : f32 to vector<16x1xf32>
    %173 = arith.divf %171, %172 : vector<16x1xf32>
    %174 = vector.broadcast %173 : vector<16x1xf32> to vector<16x32xf32>
    %175 = arith.subf %169, %174 : vector<16x32xf32>
    %176 = arith.mulf %175, %175 : vector<16x32xf32>
    %cst_74 = arith.constant dense<0.000000e+00> : vector<16xf32>
    %177 = vector.multi_reduction <add>, %176, %cst_74 [1] : vector<16x32xf32> to vector<16xf32>
    %178 = vector.shape_cast %177 : vector<16xf32> to vector<16x1xf32>
    %cst_75 = arith.constant 0.0322580636 : f32
    %179 = vector.broadcast %cst_75 : f32 to vector<16x1xf32>
    %180 = arith.mulf %178, %179 : vector<16x1xf32>
    %181 = math.sqrt %180 : vector<16x1xf32>
    %cst_76 = arith.constant 9.99999997E-7 : f32
    %182 = vector.broadcast %cst_76 : f32 to vector<16x1xf32>
    %183 = arith.addf %181, %182 : vector<16x1xf32>
    %184 = tpu.reciprocal %183 {approx = true} : vector<16x1xf32> -> vector<16x1xf32>
    %185 = vector.broadcast %8 : vector<1x32xf32> to vector<16x32xf32>
    %186 = arith.mulf %185, %175 : vector<16x32xf32>
    %187 = vector.broadcast %184 : vector<16x1xf32> to vector<16x32xf32>
    %188 = arith.mulf %186, %187 : vector<16x32xf32>
    %189 = vector.broadcast %9 : vector<1x32xf32> to vector<16x32xf32>
    %190 = arith.addf %188, %189 : vector<16x32xf32>
    %c0_77 = arith.constant 0 : index
    %c0_78 = arith.constant 0 : index
    %191 = vector.load %arg5[%c0_77, %c0_78] : memref<16x32xf32, #tpu.memory_space<vmem>>, vector<16x32xf32>
    tpu.vector_store %arg5[%c0_77, %c0_78], %190 {strides = array<i32>} : memref<16x32xf32, #tpu.memory_space<vmem>>, vector<16x32xf32>,
    return
  }
  func.func @transform_0(%arg0: i32) -> (i32, i32) {
    %c0_i32 = arith.constant 0 : i32
    %c0_i32_0 = arith.constant 0 : i32
    %c0_i32_1 = arith.constant 0 : i32
    return %c0_i32, %c0_i32_0 : i32, i32
  }
  func.func @transform_1(%arg0: i32) -> (i32, i32) {
    %c0_i32 = arith.constant 0 : i32
    %c0_i32_0 = arith.constant 0 : i32
    %c0_i32_1 = arith.constant 0 : i32
    return %c0_i32, %c0_i32_0 : i32, i32
  }
  func.func @transform_2(%arg0: i32) -> (i32, i32) {
    %c0_i32 = arith.constant 0 : i32
    %c0_i32_0 = arith.constant 0 : i32
    %c0_i32_1 = arith.constant 0 : i32
    return %c0_i32, %c0_i32_0 : i32, i32
  }
  func.func @transform_3(%arg0: i32) -> (i32, i32) {
    %c0_i32 = arith.constant 0 : i32
    %c0_i32_0 = arith.constant 0 : i32
    %c0_i32_1 = arith.constant 0 : i32
    return %c0_i32, %c0_i32_0 : i32, i32
  }
  func.func @transform_4(%arg0: i32) -> (i32, i32) {
    %c0_i32 = arith.constant 0 : i32
    %c0_i32_0 = arith.constant 0 : i32
    %c0_i32_1 = arith.constant 0 : i32
    return %c0_i32, %c0_i32_0 : i32, i32
  }
  func.func @transform_5(%arg0: i32) -> (i32, i32, i32) {
    %c0_i32 = arith.constant 0 : i32
    %c0_i32_0 = arith.constant 0 : i32
    %c0_i32_1 = arith.constant 0 : i32
    %c0_i32_2 = arith.constant 0 : i32
    return %c0_i32, %c0_i32_0, %c0_i32_1 : i32, i32, i32
  }
}

</mosaic_0001>

<llo_original>
// kernel: tpu_custom_call.1
$region0: #{tpu_custom_call.1}
  #allocation0 [shape = 'u32[]', space=smem, size = 0x4, offset = 0x4, fixed_abs, tag = 'smem constant byte address 0x4 - core index']
  #allocation1 [shape = 'u32[72,128]{1,0:T(1,128)}', space=vmem, size = 0x9000, scoped, tag = 'internal scratch']
  %s0 = inlined_call_operand.hbm [shape: f32[16,32], index: 0, kind: input, shape index: {}]
  %s1 = inlined_call_operand.hbm [shape: f32[16,16], index: 1, kind: input, shape index: {}]
  %s2 = inlined_call_operand.hbm [shape: f32[32,256], index: 2, kind: input, shape index: {}]
  %s3 = inlined_call_operand.hbm [shape: f32[8,128], index: 3, kind: input, shape index: {}]
  %s4 = inlined_call_operand.hbm [shape: f32[16,32], index: 4, kind: output, shape index: {0}]
  %s5 = inlined_call_operand.hbm [shape: f32[4,16,16], index: 5, kind: output, shape index: {1}]
  %6 = xla_tuple %s4, %s5
  %s7 = sld [smem:[#allocation0]]
  $region50: #{tpu_custom_call.1} parent=0
    _
  %s9 = ssub.s32 1, %s7
  %s10 = scalar_select 0, %s9, %s7
  $region1: #{tpu_custom_call.1} parent=0
    #allocation2 [shape = 'u8[8192]{0}', space=vmem, size = 0x2000, scoped, tag = 'input window, operand 0, single buffered']
    #allocation3 [shape = 's32[1]{0}', space=sflag, size = 0x4, scoped, tag = 'scoped memory for tpu_custom_call.1']
    #allocation4 [shape = 's32[1]{0}', space=sflag, size = 0x4, scoped, tag = 'scoped memory for tpu_custom_call.1']
    #allocation5 [shape = 'u8[8192]{0}', space=vmem, size = 0x2000, scoped, tag = 'input window, operand 1, single buffered']
    #allocation6 [shape = 's32[1]{0}', space=sflag, size = 0x4, scoped, tag = 'scoped memory for tpu_custom_call.1']
    #allocation7 [shape = 'u8[32768]{0}', space=vmem, size = 0x8000, scoped, tag = 'input window, operand 2, single buffered']
    #allocation8 [shape = 'u8[4096]{0}', space=vmem, size = 0x1000, scoped, tag = 'input window, operand 3, single buffered']
    #allocation9 [shape = 's32[1]{0}', space=sflag, size = 0x4, scoped, tag = 'scoped memory for tpu_custom_call.1']
    #allocation10 [shape = 'u8[8192]{0}', space=vmem, size = 0x2000, scoped, tag = 'output window, operand 0, single buffered']
    #allocation11 [shape = 'u8[32768]{0}', space=vmem, size = 0x8000, scoped, tag = 'output window, operand 1, single buffered']
    #allocation12 [shape = 's32[1]{0}', space=sflag, size = 0x4, scoped, tag = 'scoped memory for tpu_custom_call.1']
    %11 = vsyncpa [#allocation3], 0
    %12 = vsyncpa [#allocation6], 0
    %13 = vsyncpa [#allocation9], 0
    %14 = vsyncpa [#allocation4], 0
    %15 = vsyncpa [#allocation12], 0
    // Predicated region
    $region2: #{tpu_custom_call.1} parent=1 // pred_check
      _
    $region3: #{tpu_custom_call.1} parent=1 // pred_check_branch
      %17 = sbr.rel (0) target = $region5
    $region4: #{tpu_custom_call.1} parent=1 // pred_region
      %19 = vsyncadd [#allocation3], 0
      %s20 = sshll.u32 %s0, 4
      %s21 = int_to_ptr.hbm [resolvable:$true] %s20
      %s22 = sshll.u32 [#allocation2], 4
      %s23 = int_to_ptr.vmem [resolvable:$true] %s22
      %28 = dma.hbm_to_vmem [thread:$0]  %s21, 256, %s23, [#allocation3], 128, 128, 8
    $region5: #{tpu_custom_call.1} parent=1 // pred_fallthru
      _
    // Predicated region
    $region6: #{tpu_custom_call.1} parent=1 // pred_check
      _
    $region7: #{tpu_custom_call.1} parent=1 // pred_check_branch
      %30 = sbr.rel (0) target = $region9
    $region8: #{tpu_custom_call.1} parent=1 // pred_region
      %32 = vsyncadd [#allocation6], 0
      %s33 = sshll.u32 %s1, 4
      %s34 = int_to_ptr.hbm [resolvable:$true] %s33
      %s35 = sshll.u32 [#allocation5], 4
      %s36 = int_to_ptr.vmem [resolvable:$true] %s35
      %41 = dma.hbm_to_vmem [thread:$0]  %s34, 256, %s36, [#allocation6], 128, 128, 8
    $region9: #{tpu_custom_call.1} parent=1 // pred_fallthru
      _
    // Predicated region
    $region10: #{tpu_custom_call.1} parent=1 // pred_check
      _
    $region11: #{tpu_custom_call.1} parent=1 // pred_check_branch
      %43 = sbr.rel (0) target = $region13
    $region12: #{tpu_custom_call.1} parent=1 // pred_region
      %45 = vsyncadd [#allocation6], 0
      %s46 = sshll.u32 %s2, 4
      %s47 = int_to_ptr.hbm [resolvable:$true] %s46
      %s48 = sshll.u32 [#allocation7], 4
      %s49 = int_to_ptr.vmem [resolvable:$true] %s48
      %54 = dma.hbm_to_vmem [thread:$0]  %s47, 1024, %s49, [#allocation6], 256, 256, 16
    $region13: #{tpu_custom_call.1} parent=1 // pred_fallthru
      _
    // Predicated region
    $region14: #{tpu_custom_call.1} parent=1 // pred_check
      _
    $region15: #{tpu_custom_call.1} parent=1 // pred_check_branch
      %56 = sbr.rel (0) target = $region17
    $region16: #{tpu_custom_call.1} parent=1 // pred_region
      %58 = vsyncadd [#allocation9], 0
      %s60 = sshll.u32 %s3, 4
      %s61 = int_to_ptr.hbm [resolvable:$true] %s60
      %s62 = sshll.u32 [#allocation8], 4
      %s63 = int_to_ptr.vmem [resolvable:$true] %s62
      %65 = dma.hbm_to_vmem [thread:$0]  %s61, 128, %s63, [#allocation9]
    $region17: #{tpu_custom_call.1} parent=1 // pred_fallthru
      _
    // Predicated region
    $region18: #{tpu_custom_call.1} parent=1 // pred_check
      _
    $region19: #{tpu_custom_call.1} parent=1 // pred_check_branch
      %67 = sbr.rel (0) target = $region21
    $region20: #{tpu_custom_call.1} parent=1 // pred_region
      %69 = dma.done [#allocation3], 256
    $region21: #{tpu_custom_call.1} parent=1 // pred_fallthru
      _
    // Predicated region
    $region22: #{tpu_custom_call.1} parent=1 // pred_check
      _
    $region23: #{tpu_custom_call.1} parent=1 // pred_check_branch
      %71 = sbr.rel (0) target = $region25
    $region24: #{tpu_custom_call.1} parent=1 // pred_region
      %73 = dma.done [#allocation6], 256
    $region25: #{tpu_custom_call.1} parent=1 // pred_fallthru
      _
    // Predicated region
    $region26: #{tpu_custom_call.1} parent=1 // pred_check
      _
    $region27: #{tpu_custom_call.1} parent=1 // pred_check_branch
      %75 = sbr.rel (0) target = $region29
    $region28: #{tpu_custom_call.1} parent=1 // pred_region
      %77 = dma.done [#allocation6], 1024
    $region29: #{tpu_custom_call.1} parent=1 // pred_fallthru
      _
    // Predicated region
    $region30: #{tpu_custom_call.1} parent=1 // pred_check
      _
    $region31: #{tpu_custom_call.1} parent=1 // pred_check_branch
      %79 = sbr.rel (0) target = $region33
    $region32: #{tpu_custom_call.1} parent=1 // pred_region
      %81 = dma.done [#allocation9], 128
    $region33: #{tpu_custom_call.1} parent=1 // pred_fallthru
      _
    %v82 = vld [vmem:[#allocation2] sm:$0xff]
    %v83 = vld [vmem:[#allocation2 + $0x8] sm:$0xff]
    %v84 = vld [vmem:[#allocation5] sm:$0xff]
    %v85 = vld [vmem:[#allocation5 + $0x8] sm:$0xff]
    %vm86 = vcmp.gt.f32.partialorder %v84, 0.0
    %vm87 = vcmp.gt.f32.partialorder %v85, 0.0
    %v88 = vld [vmem:[#allocation8] sm:$0x1]
    %v89 = vld [vmem:[#allocation8 + $0x1] sm:$0x1]
    %v90 = vld [vmem:[#allocation8 + $0x2] sm:$0x1]
    %v91 = vld [vmem:[#allocation8 + $0x3] sm:$0x1]
    %v92 = vld [vmem:[#allocation8 + $0x4] sm:$0x1]
    %v93 = vld [vmem:[#allocation8 + $0x5] sm:$0x1]
    %v94 = vld [vmem:[#allocation8 + $0x6] sm:$0x1]
    %v95 = vld [vmem:[#allocation8 + $0x7] sm:$0x1]
    %v96 = vld [vmem:[#allocation7] sm:$0xff]
    %v97 = vld [vmem:[#allocation7 + $0x10] sm:$0xff]
    %v98 = vld [vmem:[#allocation7 + $0x20] sm:$0xff]
    %v99 = vld [vmem:[#allocation7 + $0x30] sm:$0xff]
    %v100 = vld [vmem:[#allocation7 + $0x8] sm:$0xff]
    %v101 = vld [vmem:[#allocation7 + $0x18] sm:$0xff]
    %v102 = vld [vmem:[#allocation7 + $0x28] sm:$0xff]
    %v103 = vld [vmem:[#allocation7 + $0x38] sm:$0xff]
    %v104 = vperm.slane %v88, 0
    %vm105 = vcmask 261120
    %v107 = vsel %vm105, %v82, 0
    %v110 = vsel %vm105, %v83, 0
    %112 = vmatpush.msra.mxu0 0.0
    %113 = vmatpush.msra.mxu0 0.0
    %114 = vmatpush.msra.mxu0 0.0
    %115 = vmatpush.msra.mxu0 0.0
    %116 = vmatpush.msra.mxu0 0.0
    %117 = vmatpush.msra.mxu0 0.0
    %118 = vmatpush.msra.mxu0 0.0
    %119 = vmatpush.msra.mxu0 0.0
    %120 = vmatpush.msra.mxu0 0.0
    %121 = vmatpush.msra.mxu0 0.0
    %122 = vmatpush.msra.mxu0 0.0
    %123 = vmatpush.msra.mxu0 0.0
    %124 = vmatpush.msra.mxu0 %v99
    %125 = vmatpush.msra.mxu0 %v98
    %126 = vmatpush.msra.mxu0 %v97
    %127 = vmatpush.msra.mxu0 %v96
    %128 = vmatmul.f32.gmra.mxu0 %v107
    %v129 = vpop.f32.mrf.mxu0
    %v130 = vadd.f32 %v104, %v129
    %131 = vmatmul.f32.gmra.mxu0 %v110
    %v132 = vpop.f32.mrf.mxu0
    %v133 = vadd.f32 %v104, %v132
    %134 = vdwg.mxu0
    %v135 = vmul.f32 %v130, 0.35355338
    %v136 = vmul.f32 %v133, 0.35355338
    %139 = vrot.lane.b32.xlu0 %v130, 96
    %v140 = vpop.permute.xlu0 %139
    %141 = vrot.lane.b32.xlu0 %v133, 96
    %v142 = vpop.permute.xlu0 %141
    %vm143 = vcmask 64512
    %v145 = vsel %vm143, %v135, 0
    %v148 = vsel %vm143, %v136, 0
    %v150 = vsel %vm143, %v140, 0
    %v152 = vsel %vm143, %v142, 0
    %154 = vmatpush.xpose.msra.mxu0 0.0
    %155 = vmatpush.xpose.msra.mxu0 0.0
    %156 = vmatpush.xpose.msra.mxu0 0.0
    %157 = vmatpush.xpose.msra.mxu0 0.0
    %158 = vmatpush.xpose.msra.mxu0 0.0
    %159 = vmatpush.xpose.msra.mxu0 0.0
    %160 = vmatpush.xpose.msra.mxu0 0.0
    %161 = vmatpush.xpose.msra.mxu0 0.0
    %162 = vmatpush.xpose.msra.mxu0 0.0
    %163 = vmatpush.xpose.msra.mxu0 0.0
    %164 = vmatpush.xpose.msra.mxu0 0.0
    %165 = vmatpush.xpose.msra.mxu0 0.0
    %166 = vmatpush.xpose.msra.mxu0 0.0
    %167 = vmatpush.xpose.msra.mxu0 0.0
    %168 = vmatpush.xpose.msra.mxu0 %v152
    %169 = vmatpush.xpose.msra.mxu0 %v150
    %170 = vmatmul.f32.gmra.mxu0 %v145
    %v171 = vpop.f32.mrf.mxu0
    %v172 = vadd.f32 0.0, %v171
    %173 = vmatmul.f32.gmra.mxu0 %v148
    %v174 = vpop.f32.mrf.mxu0
    %v175 = vadd.f32 0.0, %v174
    %176 = vdwg.mxu0
    %v177 = vsel %vm86, %v172, -1e+09
    %v178 = vsel %vm87, %v175, -1e+09
    %vm179 = vcmask 130048
    %v180 = vsel %vm179, %v177, -inf
    %181 = vmax.xlane.f32.xlu0 %v180
    %v182 = vpop.xlane.xlu0 %181
    %v183 = vsel %vm179, %v178, -inf
    %184 = vmax.xlane.f32.xlu0 %v183
    %v185 = vpop.xlane.xlu0 %184
    %v186 = vsub.f32 %v177, %v182
    %v187 = vsub.f32 %v178, %v185
    %v188 = vmul.f32 %v186, 1.442695
    %v189 = vpow.pop %v188
    %v190 = vmul.f32 %v187, 1.442695
    %v191 = vpow.pop %v190
    %v192 = vsel %vm179, %v189, 0.0
    %193 = vadd.xlane.f32.xlu0 %v192
    %v194 = vpop.xlane.xlu0 %193
    %v195 = vsel %vm179, %v191, 0.0
    %196 = vadd.xlane.f32.xlu0 %v195
    %v197 = vpop.xlane.xlu0 %196
    %v198 = vrcp.pop %v194
    %v199 = vrcp.pop %v197
    %v200 = vmul.f32 %v189, %v198
    %v201 = vmul.f32 %v191, %v199
    %202 = vst.msk [vmem:[#allocation11] sm:$0xff] %vm179, %v200
    %203 = vst.msk [vmem:[#allocation11 + $0x8] sm:$0xff] %vm179, %v201
    %204 = vrot.lane.b32.xlu0 %v130, 64
    %v205 = vpop.permute.xlu0 %204
    %206 = vrot.lane.b32.xlu0 %v133, 64
    %v207 = vpop.permute.xlu0 %206
    %v211 = vsel %vm179, %v200, 0
    %v214 = vsel %vm179, %v201, 0
    %216 = vmatpush.msra.mxu0 0.0
    %217 = vmatpush.msra.mxu0 0.0
    %218 = vmatpush.msra.mxu0 0.0
    %219 = vmatpush.msra.mxu0 0.0
    %220 = vmatpush.msra.mxu0 0.0
    %221 = vmatpush.msra.mxu0 0.0
    %222 = vmatpush.msra.mxu0 0.0
    %223 = vmatpush.msra.mxu0 0.0
    %224 = vmatpush.msra.mxu0 0.0
    %225 = vmatpush.msra.mxu0 0.0
    %226 = vmatpush.msra.mxu0 0.0
    %227 = vmatpush.msra.mxu0 0.0
    %228 = vmatpush.msra.mxu0 0.0
    %229 = vmatpush.msra.mxu0 0.0
    %230 = vmatpush.msra.mxu0 %v207
    %231 = vmatpush.msra.mxu0 %v205
    %232 = vmatmul.f32.gmra.mxu0 %v211
    %v233 = vpop.f32.mrf.mxu0
    %v234 = vadd.f32 0.0, %v233
    %235 = vmatmul.f32.gmra.mxu0 %v214
    %v236 = vpop.f32.mrf.mxu0
    %v237 = vadd.f32 0.0, %v236
    %238 = vdwg.mxu0
    %v239 = vld [vmem:[#allocation7] sm:$0xff]
    %240 = vrot.lane.b32.xlu0 %v135, 120
    %v241 = vpop.permute.xlu0 %240
    %242 = vrot.lane.b32.xlu0 %v136, 120
    %v243 = vpop.permute.xlu0 %242
    %244 = vrot.lane.b32.xlu0 %v130, 88
    %v245 = vpop.permute.xlu0 %244
    %246 = vrot.lane.b32.xlu0 %v133, 88
    %v247 = vpop.permute.xlu0 %246
    %v248 = vsel %vm143, %v241, 0
    %v250 = vsel %vm143, %v243, 0
    %v252 = vsel %vm143, %v245, 0
    %v254 = vsel %vm143, %v247, 0
    %256 = vmatpush.xpose.msra.mxu0 0.0
    %257 = vmatpush.xpose.msra.mxu0 0.0
    %258 = vmatpush.xpose.msra.mxu0 0.0
    %259 = vmatpush.xpose.msra.mxu0 0.0
    %260 = vmatpush.xpose.msra.mxu0 0.0
    %261 = vmatpush.xpose.msra.mxu0 0.0
    %262 = vmatpush.xpose.msra.mxu0 0.0
    %263 = vmatpush.xpose.msra.mxu0 0.0
    %264 = vmatpush.xpose.msra.mxu0 0.0
    %265 = vmatpush.xpose.msra.mxu0 0.0
    %266 = vmatpush.xpose.msra.mxu0 0.0
    %267 = vmatpush.xpose.msra.mxu0 0.0
    %268 = vmatpush.xpose.msra.mxu0 0.0
    %269 = vmatpush.xpose.msra.mxu0 0.0
    %270 = vmatpush.xpose.msra.mxu0 %v254
    %271 = vmatpush.xpose.msra.mxu0 %v252
    %272 = vmatmul.f32.gmra.mxu0 %v248
    %v273 = vpop.f32.mrf.mxu0
    %v274 = vadd.f32 0.0, %v273
    %275 = vmatmul.f32.gmra.mxu0 %v250
    %v276 = vpop.f32.mrf.mxu0
    %v277 = vadd.f32 0.0, %v276
    %278 = vdwg.mxu0
    %v279 = vsel %vm86, %v274, -1e+09
    %v280 = vsel %vm87, %v277, -1e+09
    %v281 = vsel %vm179, %v279, -inf
    %282 = vmax.xlane.f32.xlu0 %v281
    %v283 = vpop.xlane.xlu0 %282
    %v284 = vsel %vm179, %v280, -inf
    %285 = vmax.xlane.f32.xlu0 %v284
    %v286 = vpop.xlane.xlu0 %285
    %v287 = vsub.f32 %v279, %v283
    %v288 = vsub.f32 %v280, %v286
    %v289 = vmul.f32 %v287, 1.442695
    %v290 = vpow.pop %v289
    %v291 = vmul.f32 %v288, 1.442695
    %v292 = vpow.pop %v291
    %v293 = vsel %vm179, %v290, 0.0
    %294 = vadd.xlane.f32.xlu0 %v293
    %v295 = vpop.xlane.xlu0 %294
    %v296 = vsel %vm179, %v292, 0.0
    %297 = vadd.xlane.f32.xlu0 %v296
    %v298 = vpop.xlane.xlu0 %297
    %v299 = vrcp.pop %v295
    %v300 = vrcp.pop %v298
    %v301 = vmul.f32 %v290, %v299
    %v302 = vmul.f32 %v292, %v300
    %s303 = scalar_lea.vmem [#allocation11], 16
    %304 = vst.msk [vmem:[%s303] sm:$0xff] %vm179, %v301
    %305 = vst.msk [vmem:[%s303 + $0x8] sm:$0xff] %vm179, %v302
    %306 = vrot.lane.b32.xlu0 %v130, 56
    %v307 = vpop.permute.xlu0 %306
    %308 = vrot.lane.b32.xlu0 %v133, 56
    %v309 = vpop.permute.xlu0 %308
    %v313 = vsel %vm179, %v301, 0
    %v316 = vsel %vm179, %v302, 0
    %318 = vmatpush.msra.mxu0 0.0
    %319 = vmatpush.msra.mxu0 0.0
    %320 = vmatpush.msra.mxu0 0.0
    %321 = vmatpush.msra.mxu0 0.0
    %322 = vmatpush.msra.mxu0 0.0
    %323 = vmatpush.msra.mxu0 0.0
    %324 = vmatpush.msra.mxu0 0.0
    %325 = vmatpush.msra.mxu0 0.0
    %326 = vmatpush.msra.mxu0 0.0
    %327 = vmatpush.msra.mxu0 0.0
    %328 = vmatpush.msra.mxu0 0.0
    %329 = vmatpush.msra.mxu0 0.0
    %330 = vmatpush.msra.mxu0 0.0
    %331 = vmatpush.msra.mxu0 0.0
    %332 = vmatpush.msra.mxu0 %v309
    %333 = vmatpush.msra.mxu0 %v307
    %334 = vmatmul.f32.gmra.mxu0 %v313
    %v335 = vpop.f32.mrf.mxu0
    %v336 = vadd.f32 0.0, %v335
    %337 = vmatmul.f32.gmra.mxu0 %v316
    %v338 = vpop.f32.mrf.mxu0
    %v339 = vadd.f32 0.0, %v338
    %340 = vdwg.mxu0
    %v341 = vld [vmem:[#allocation7 + $0x10] sm:$0xff]
    %343 = vrot.lane.b32.xlu0 %v341, 32
    %v344 = vpop.permute.xlu0 %343
    %v347 = vsel %vm143, %v336, 0
    %v350 = vsel %vm143, %v339, 0
    %352 = vmatpush.msra.mxu0 0.0
    %353 = vmatpush.msra.mxu0 0.0
    %354 = vmatpush.msra.mxu0 0.0
    %355 = vmatpush.msra.mxu0 0.0
    %356 = vmatpush.msra.mxu0 0.0
    %357 = vmatpush.msra.mxu0 0.0
    %358 = vmatpush.msra.mxu0 0.0
    %359 = vmatpush.msra.mxu0 0.0
    %360 = vmatpush.msra.mxu0 0.0
    %361 = vmatpush.msra.mxu0 0.0
    %362 = vmatpush.msra.mxu0 0.0
    %363 = vmatpush.msra.mxu0 0.0
    %364 = vmatpush.msra.mxu0 0.0
    %365 = vmatpush.msra.mxu0 0.0
    %366 = vmatpush.msra.mxu0 0.0
    %367 = vmatpush.msra.mxu0 %v344
    %368 = vmatmul.f32.gmra.mxu0 %v347
    %v369 = vpop.f32.mrf.mxu0
    %v370 = vadd.f32 0.0, %v369
    %371 = vmatmul.f32.gmra.mxu0 %v350
    %v372 = vpop.f32.mrf.mxu0
    %v373 = vadd.f32 0.0, %v372
    %374 = vdwg.mxu0
    %376 = vrot.lane.b32.xlu0 %v239, 32
    %v377 = vpop.permute.xlu0 %376
    %v380 = vsel %vm143, %v234, 0
    %v383 = vsel %vm143, %v237, 0
    %385 = vmatpush.msra.mxu0 0.0
    %386 = vmatpush.msra.mxu0 0.0
    %387 = vmatpush.msra.mxu0 0.0
    %388 = vmatpush.msra.mxu0 0.0
    %389 = vmatpush.msra.mxu0 0.0
    %390 = vmatpush.msra.mxu0 0.0
    %391 = vmatpush.msra.mxu0 0.0
    %392 = vmatpush.msra.mxu0 0.0
    %393 = vmatpush.msra.mxu0 0.0
    %394 = vmatpush.msra.mxu0 0.0
    %395 = vmatpush.msra.mxu0 0.0
    %396 = vmatpush.msra.mxu0 0.0
    %397 = vmatpush.msra.mxu0 0.0
    %398 = vmatpush.msra.mxu0 0.0
    %399 = vmatpush.msra.mxu0 0.0
    %400 = vmatpush.msra.mxu0 %v377
    %401 = vmatmul.f32.gmra.mxu0 %v380
    %v402 = vpop.f32.mrf.mxu0
    %v403 = vadd.f32 %v370, %v402
    %404 = vmatmul.f32.gmra.mxu0 %v383
    %v405 = vpop.f32.mrf.mxu0
    %v406 = vadd.f32 %v373, %v405
    %407 = vdwg.mxu0
    %408 = vrot.lane.b32.xlu0 %v135, 112
    %v409 = vpop.permute.xlu0 %408
    %410 = vrot.lane.b32.xlu0 %v136, 112
    %v411 = vpop.permute.xlu0 %410
    %412 = vrot.lane.b32.xlu0 %v130, 80
    %v413 = vpop.permute.xlu0 %412
    %414 = vrot.lane.b32.xlu0 %v133, 80
    %v415 = vpop.permute.xlu0 %414
    %v416 = vsel %vm143, %v409, 0
    %v418 = vsel %vm143, %v411, 0
    %v420 = vsel %vm143, %v413, 0
    %v422 = vsel %vm143, %v415, 0
    %424 = vmatpush.xpose.msra.mxu0 0.0
    %425 = vmatpush.xpose.msra.mxu0 0.0
    %426 = vmatpush.xpose.msra.mxu0 0.0
    %427 = vmatpush.xpose.msra.mxu0 0.0
    %428 = vmatpush.xpose.msra.mxu0 0.0
    %429 = vmatpush.xpose.msra.mxu0 0.0
    %430 = vmatpush.xpose.msra.mxu0 0.0
    %431 = vmatpush.xpose.msra.mxu0 0.0
    %432 = vmatpush.xpose.msra.mxu0 0.0
    %433 = vmatpush.xpose.msra.mxu0 0.0
    %434 = vmatpush.xpose.msra.mxu0 0.0
    %435 = vmatpush.xpose.msra.mxu0 0.0
    %436 = vmatpush.xpose.msra.mxu0 0.0
    %437 = vmatpush.xpose.msra.mxu0 0.0
    %438 = vmatpush.xpose.msra.mxu0 %v422
    %439 = vmatpush.xpose.msra.mxu0 %v420
    %440 = vmatmul.f32.gmra.mxu0 %v416
    %v441 = vpop.f32.mrf.mxu0
    %v442 = vadd.f32 0.0, %v441
    %443 = vmatmul.f32.gmra.mxu0 %v418
    %v444 = vpop.f32.mrf.mxu0
    %v445 = vadd.f32 0.0, %v444
    %446 = vdwg.mxu0
    %v447 = vsel %vm86, %v442, -1e+09
    %v448 = vsel %vm87, %v445, -1e+09
    %v449 = vsel %vm179, %v447, -inf
    %450 = vmax.xlane.f32.xlu0 %v449
    %v451 = vpop.xlane.xlu0 %450
    %v452 = vsel %vm179, %v448, -inf
    %453 = vmax.xlane.f32.xlu0 %v452
    %v454 = vpop.xlane.xlu0 %453
    %v455 = vsub.f32 %v447, %v451
    %v456 = vsub.f32 %v448, %v454
    %v457 = vmul.f32 %v455, 1.442695
    %v458 = vpow.pop %v457
    %v459 = vmul.f32 %v456, 1.442695
    %v460 = vpow.pop %v459
    %v461 = vsel %vm179, %v458, 0.0
    %462 = vadd.xlane.f32.xlu0 %v461
    %v463 = vpop.xlane.xlu0 %462
    %v464 = vsel %vm179, %v460, 0.0
    %465 = vadd.xlane.f32.xlu0 %v464
    %v466 = vpop.xlane.xlu0 %465
    %v467 = vrcp.pop %v463
    %v468 = vrcp.pop %v466
    %v469 = vmul.f32 %v458, %v467
    %v470 = vmul.f32 %v460, %v468
    %s471 = scalar_lea.vmem [#allocation11], 32
    %472 = vst.msk [vmem:[%s471] sm:$0xff] %vm179, %v469
    %473 = vst.msk [vmem:[%s471 + $0x8] sm:$0xff] %vm179, %v470
    %474 = vrot.lane.b32.xlu0 %v130, 48
    %v475 = vpop.permute.xlu0 %474
    %476 = vrot.lane.b32.xlu0 %v133, 48
    %v477 = vpop.permute.xlu0 %476
    %v481 = vsel %vm179, %v469, 0
    %v484 = vsel %vm179, %v470, 0
    %486 = vmatpush.msra.mxu0 0.0
    %487 = vmatpush.msra.mxu0 0.0
    %488 = vmatpush.msra.mxu0 0.0
    %489 = vmatpush.msra.mxu0 0.0
    %490 = vmatpush.msra.mxu0 0.0
    %491 = vmatpush.msra.mxu0 0.0
    %492 = vmatpush.msra.mxu0 0.0
    %493 = vmatpush.msra.mxu0 0.0
    %494 = vmatpush.msra.mxu0 0.0
    %495 = vmatpush.msra.mxu0 0.0
    %496 = vmatpush.msra.mxu0 0.0
    %497 = vmatpush.msra.mxu0 0.0
    %498 = vmatpush.msra.mxu0 0.0
    %499 = vmatpush.msra.mxu0 0.0
    %500 = vmatpush.msra.mxu0 %v477
    %501 = vmatpush.msra.mxu0 %v475
    %502 = vmatmul.f32.gmra.mxu0 %v481
    %v503 = vpop.f32.mrf.mxu0
    %v504 = vadd.f32 0.0, %v503
    %505 = vmatmul.f32.gmra.mxu0 %v484
    %v506 = vpop.f32.mrf.mxu0
    %v507 = vadd.f32 0.0, %v506
    %508 = vdwg.mxu0
    %v509 = vld [vmem:[#allocation7 + $0x20] sm:$0xff]
    %511 = vrot.lane.b32.xlu0 %v509, 32
    %v512 = vpop.permute.xlu0 %511
    %v515 = vsel %vm143, %v504, 0
    %v518 = vsel %vm143, %v507, 0
    %520 = vmatpush.msra.mxu0 0.0
    %521 = vmatpush.msra.mxu0 0.0
    %522 = vmatpush.msra.mxu0 0.0
    %523 = vmatpush.msra.mxu0 0.0
    %524 = vmatpush.msra.mxu0 0.0
    %525 = vmatpush.msra.mxu0 0.0
    %526 = vmatpush.msra.mxu0 0.0
    %527 = vmatpush.msra.mxu0 0.0
    %528 = vmatpush.msra.mxu0 0.0
    %529 = vmatpush.msra.mxu0 0.0
    %530 = vmatpush.msra.mxu0 0.0
    %531 = vmatpush.msra.mxu0 0.0
    %532 = vmatpush.msra.mxu0 0.0
    %533 = vmatpush.msra.mxu0 0.0
    %534 = vmatpush.msra.mxu0 0.0
    %535 = vmatpush.msra.mxu0 %v512
    %536 = vmatmul.f32.gmra.mxu0 %v515
    %v537 = vpop.f32.mrf.mxu0
    %v538 = vadd.f32 0.0, %v537
    %539 = vmatmul.f32.gmra.mxu0 %v518
    %v540 = vpop.f32.mrf.mxu0
    %v541 = vadd.f32 0.0, %v540
    %542 = vdwg.mxu0
    %v543 = vadd.f32 %v403, %v538
    %v544 = vadd.f32 %v406, %v541
    %545 = vrot.lane.b32.xlu0 %v135, 104
    %v546 = vpop.permute.xlu0 %545
    %547 = vrot.lane.b32.xlu0 %v136, 104
    %v548 = vpop.permute.xlu0 %547
    %549 = vrot.lane.b32.xlu0 %v130, 72
    %v550 = vpop.permute.xlu0 %549
    %551 = vrot.lane.b32.xlu0 %v133, 72
    %v552 = vpop.permute.xlu0 %551
    %v553 = vsel %vm143, %v546, 0
    %v555 = vsel %vm143, %v548, 0
    %v557 = vsel %vm143, %v550, 0
    %v559 = vsel %vm143, %v552, 0
    %561 = vmatpush.xpose.msra.mxu0 0.0
    %562 = vmatpush.xpose.msra.mxu0 0.0
    %563 = vmatpush.xpose.msra.mxu0 0.0
    %564 = vmatpush.xpose.msra.mxu0 0.0
    %565 = vmatpush.xpose.msra.mxu0 0.0
    %566 = vmatpush.xpose.msra.mxu0 0.0
    %567 = vmatpush.xpose.msra.mxu0 0.0
    %568 = vmatpush.xpose.msra.mxu0 0.0
    %569 = vmatpush.xpose.msra.mxu0 0.0
    %570 = vmatpush.xpose.msra.mxu0 0.0
    %571 = vmatpush.xpose.msra.mxu0 0.0
    %572 = vmatpush.xpose.msra.mxu0 0.0
    %573 = vmatpush.xpose.msra.mxu0 0.0
    %574 = vmatpush.xpose.msra.mxu0 0.0
    %575 = vmatpush.xpose.msra.mxu0 %v559
    %576 = vmatpush.xpose.msra.mxu0 %v557
    %577 = vmatmul.f32.gmra.mxu0 %v553
    %v578 = vpop.f32.mrf.mxu0
    %v579 = vadd.f32 0.0, %v578
    %580 = vmatmul.f32.gmra.mxu0 %v555
    %v581 = vpop.f32.mrf.mxu0
    %v582 = vadd.f32 0.0, %v581
    %583 = vdwg.mxu0
    %v584 = vsel %vm86, %v579, -1e+09
    %v585 = vsel %vm87, %v582, -1e+09
    %v586 = vsel %vm179, %v584, -inf
    %587 = vmax.xlane.f32.xlu0 %v586
    %v588 = vpop.xlane.xlu0 %587
    %v589 = vsel %vm179, %v585, -inf
    %590 = vmax.xlane.f32.xlu0 %v589
    %v591 = vpop.xlane.xlu0 %590
    %v592 = vsub.f32 %v584, %v588
    %v593 = vsub.f32 %v585, %v591
    %v594 = vmul.f32 %v592, 1.442695
    %v595 = vpow.pop %v594
    %v596 = vmul.f32 %v593, 1.442695
    %v597 = vpow.pop %v596
    %v598 = vsel %vm179, %v595, 0.0
    %599 = vadd.xlane.f32.xlu0 %v598
    %v600 = vpop.xlane.xlu0 %599
    %v601 = vsel %vm179, %v597, 0.0
    %602 = vadd.xlane.f32.xlu0 %v601
    %v603 = vpop.xlane.xlu0 %602
    %v604 = vrcp.pop %v600
    %v605 = vrcp.pop %v603
    %v606 = vmul.f32 %v595, %v604
    %v607 = vmul.f32 %v597, %v605
    %s608 = scalar_lea.vmem [#allocation11], 48
    %609 = vst.msk [vmem:[%s608] sm:$0xff] %vm179, %v606
    %610 = vst.msk [vmem:[%s608 + $0x8] sm:$0xff] %vm179, %v607
    %611 = vrot.lane.b32.xlu0 %v130, 40
    %v612 = vpop.permute.xlu0 %611
    %613 = vrot.lane.b32.xlu0 %v133, 40
    %v614 = vpop.permute.xlu0 %613
    %v618 = vsel %vm179, %v606, 0
    %v621 = vsel %vm179, %v607, 0
    %623 = vmatpush.msra.mxu0 0.0
    %624 = vmatpush.msra.mxu0 0.0
    %625 = vmatpush.msra.mxu0 0.0
    %626 = vmatpush.msra.mxu0 0.0
    %627 = vmatpush.msra.mxu0 0.0
    %628 = vmatpush.msra.mxu0 0.0
    %629 = vmatpush.msra.mxu0 0.0
    %630 = vmatpush.msra.mxu0 0.0
    %631 = vmatpush.msra.mxu0 0.0
    %632 = vmatpush.msra.mxu0 0.0
    %633 = vmatpush.msra.mxu0 0.0
    %634 = vmatpush.msra.mxu0 0.0
    %635 = vmatpush.msra.mxu0 0.0
    %636 = vmatpush.msra.mxu0 0.0
    %637 = vmatpush.msra.mxu0 %v614
    %638 = vmatpush.msra.mxu0 %v612
    %639 = vmatmul.f32.gmra.mxu0 %v618
    %v640 = vpop.f32.mrf.mxu0
    %v641 = vadd.f32 0.0, %v640
    %642 = vmatmul.f32.gmra.mxu0 %v621
    %v643 = vpop.f32.mrf.mxu0
    %v644 = vadd.f32 0.0, %v643
    %645 = vdwg.mxu0
    %v646 = vld [vmem:[#allocation7 + $0x30] sm:$0xff]
    %648 = vrot.lane.b32.xlu0 %v646, 32
    %v649 = vpop.permute.xlu0 %648
    %v652 = vsel %vm143, %v641, 0
    %v655 = vsel %vm143, %v644, 0
    %657 = vmatpush.msra.mxu0 0.0
    %658 = vmatpush.msra.mxu0 0.0
    %659 = vmatpush.msra.mxu0 0.0
    %660 = vmatpush.msra.mxu0 0.0
    %661 = vmatpush.msra.mxu0 0.0
    %662 = vmatpush.msra.mxu0 0.0
    %663 = vmatpush.msra.mxu0 0.0
    %664 = vmatpush.msra.mxu0 0.0
    %665 = vmatpush.msra.mxu0 0.0
    %666 = vmatpush.msra.mxu0 0.0
    %667 = vmatpush.msra.mxu0 0.0
    %668 = vmatpush.msra.mxu0 0.0
    %669 = vmatpush.msra.mxu0 0.0
    %670 = vmatpush.msra.mxu0 0.0
    %671 = vmatpush.msra.mxu0 0.0
    %672 = vmatpush.msra.mxu0 %v649
    %673 = vmatmul.f32.gmra.mxu0 %v652
    %v674 = vpop.f32.mrf.mxu0
    %v675 = vadd.f32 0.0, %v674
    %676 = vmatmul.f32.gmra.mxu0 %v655
    %v677 = vpop.f32.mrf.mxu0
    %v678 = vadd.f32 0.0, %v677
    %679 = vdwg.mxu0
    %v680 = vadd.f32 %v543, %v675
    %v681 = vadd.f32 %v544, %v678
    %v682 = vadd.f32 %v82, %v680
    %v683 = vadd.f32 %v83, %v681
    %v684 = vperm.slane %v89, 0
    %v685 = vadd.f32 %v682, %v684
    %v686 = vadd.f32 %v683, %v684
    %v687 = vsel %vm105, %v685, 0.0
    %688 = vadd.xlane.f32.xlu0 %v687
    %v689 = vpop.xlane.xlu0 %688
    %v690 = vsel %vm105, %v686, 0.0
    %691 = vadd.xlane.f32.xlu0 %v690
    %v692 = vpop.xlane.xlu0 %691
    %v693 = vrcp.pop 32.0
    %v694 = vmul.f32 32.0, %v693
    %v695 = vsub.f32 1.0, %v694
    %v696 = vmul.f32 %v693, %v695
    %v697 = vadd.f32 %v693, %v696
    %vm698 = vweird.f32 %v693
    %v699 = vsel %vm698, %v693, %v697
    %v700 = vmul.f32 %v689, %v699
    %v701 = vmul.f32 %v692, %v699
    %v702 = vsub.f32 %v685, %v700
    %v703 = vsub.f32 %v686, %v701
    %v704 = vmul.f32 %v702, %v702
    %v705 = vmul.f32 %v703, %v703
    %v706 = vsel %vm105, %v704, 0.0
    %707 = vadd.xlane.f32.xlu0 %v706
    %v708 = vpop.xlane.xlu0 %707
    %v709 = vsel %vm105, %v705, 0.0
    %710 = vadd.xlane.f32.xlu0 %v709
    %v711 = vpop.xlane.xlu0 %710
    %v712 = vmul.f32 %v708, 0.032258064
    %v713 = vmul.f32 %v711, 0.032258064
    %v714 = vrsqrt.pop %v712
    %v715 = vmul.f32 %v714, %v712
    %v716 = vmul.f32 %v715, %v714
    %v717 = vmul.f32 0.5, %v716
    %v718 = vsub.f32 1.5, %v717
    %v719 = vmul.f32 %v714, %v718
    %v720 = vmul.f32 %v712, %v719
    %vm721 = vcmp.eq.f32.partialorder %v712, inf
    %v722 = vsel %vm721, %v712, %v720
    %vm723 = vcmp.eq.f32.partialorder %v712, 0.0
    %v724 = vand.u32 %v712, 2147483648
    %v725 = vsel %vm723, %v724, %v722
    %v726 = vrsqrt.pop %v713
    %v727 = vmul.f32 %v726, %v713
    %v728 = vmul.f32 %v727, %v726
    %v729 = vmul.f32 0.5, %v728
    %v730 = vsub.f32 1.5, %v729
    %v731 = vmul.f32 %v726, %v730
    %v732 = vmul.f32 %v713, %v731
    %vm733 = vcmp.eq.f32.partialorder %v713, inf
    %v734 = vsel %vm733, %v713, %v732
    %vm735 = vcmp.eq.f32.partialorder %v713, 0.0
    %v736 = vand.u32 %v713, 2147483648
    %v737 = vsel %vm735, %v736, %v734
    %v738 = vadd.f32 %v725, 1e-06
    %v739 = vadd.f32 %v737, 1e-06
    %v740 = vrcp.pop %v738
    %v741 = vrcp.pop %v739
    %v742 = vperm.slane %v92, 0
    %v743 = vmul.f32 %v742, %v702
    %v744 = vmul.f32 %v742, %v703
    %v745 = vmul.f32 %v743, %v740
    %v746 = vmul.f32 %v744, %v741
    %v747 = vperm.slane %v93, 0
    %v748 = vadd.f32 %v745, %v747
    %v749 = vadd.f32 %v746, %v747
    %v750 = vsel %vm105, %v748, 0.0
    %751 = vadd.xlane.f32.xlu0 %v750
    %v752 = vpop.xlane.xlu0 %751
    %v753 = vsel %vm105, %v749, 0.0
    %754 = vadd.xlane.f32.xlu0 %v753
    %v755 = vpop.xlane.xlu0 %754
    %v756 = vmul.f32 %v752, %v699
    %v757 = vmul.f32 %v755, %v699
    %v758 = vsub.f32 %v748, %v756
    %v759 = vsub.f32 %v749, %v757
    %v760 = vmul.f32 %v758, %v758
    %v761 = vmul.f32 %v759, %v759
    %v762 = vsel %vm105, %v760, 0.0
    %763 = vadd.xlane.f32.xlu0 %v762
    %v764 = vpop.xlane.xlu0 %763
    %v765 = vsel %vm105, %v761, 0.0
    %766 = vadd.xlane.f32.xlu0 %v765
    %v767 = vpop.xlane.xlu0 %766
    %v768 = vmul.f32 %v764, 0.032258064
    %v769 = vmul.f32 %v767, 0.032258064
    %v770 = vrsqrt.pop %v768
    %v771 = vmul.f32 %v770, %v768
    %v772 = vmul.f32 %v771, %v770
    %v773 = vmul.f32 0.5, %v772
    %v774 = vsub.f32 1.5, %v773
    %v775 = vmul.f32 %v770, %v774
    %v776 = vmul.f32 %v768, %v775
    %vm777 = vcmp.eq.f32.partialorder %v768, inf
    %v778 = vsel %vm777, %v768, %v776
    %vm779 = vcmp.eq.f32.partialorder %v768, 0.0
    %v780 = vand.u32 %v768, 2147483648
    %v781 = vsel %vm779, %v780, %v778
    %v782 = vrsqrt.pop %v769
    %v783 = vmul.f32 %v782, %v769
    %v784 = vmul.f32 %v783, %v782
    %v785 = vmul.f32 0.5, %v784
    %v786 = vsub.f32 1.5, %v785
    %v787 = vmul.f32 %v782, %v786
    %v788 = vmul.f32 %v769, %v787
    %vm789 = vcmp.eq.f32.partialorder %v769, inf
    %v790 = vsel %vm789, %v769, %v788
    %vm791 = vcmp.eq.f32.partialorder %v769, 0.0
    %v792 = vand.u32 %v769, 2147483648
    %v793 = vsel %vm791, %v792, %v790
    %v794 = vadd.f32 %v781, 1e-06
    %v795 = vadd.f32 %v793, 1e-06
    %v796 = vrcp.pop %v794
    %v797 = vrcp.pop %v795
    %v798 = vperm.slane %v94, 0
    %v799 = vmul.f32 %v798, %v758
    %v800 = vmul.f32 %v798, %v759
    %v801 = vmul.f32 %v799, %v796
    %v802 = vmul.f32 %v800, %v797
    %v803 = vperm.slane %v95, 0
    %v804 = vadd.f32 %v801, %v803
    %v805 = vadd.f32 %v802, %v803
    %v806 = vperm.slane %v90, 0
    %v808 = vsel %vm105, %v804, 0
    %v811 = vsel %vm105, %v805, 0
    %813 = vmatpush.msra.mxu0 0.0
    %814 = vmatpush.msra.mxu0 0.0
    %815 = vmatpush.msra.mxu0 0.0
    %816 = vmatpush.msra.mxu0 0.0
    %817 = vmatpush.msra.mxu0 0.0
    %818 = vmatpush.msra.mxu0 0.0
    %819 = vmatpush.msra.mxu0 0.0
    %820 = vmatpush.msra.mxu0 0.0
    %821 = vmatpush.msra.mxu0 0.0
    %822 = vmatpush.msra.mxu0 0.0
    %823 = vmatpush.msra.mxu0 0.0
    %824 = vmatpush.msra.mxu0 0.0
    %825 = vmatpush.msra.mxu0 %v103
    %826 = vmatpush.msra.mxu0 %v102
    %827 = vmatpush.msra.mxu0 %v101
    %828 = vmatpush.msra.mxu0 %v100
    %829 = vmatmul.f32.gmra.mxu0 %v808
    %v830 = vpop.f32.mrf.mxu0
    %v831 = vadd.f32 %v806, %v830
    %832 = vmatmul.f32.gmra.mxu0 %v811
    %v833 = vpop.f32.mrf.mxu0
    %v834 = vadd.f32 %v806, %v833
    %835 = vdwg.mxu0
    %v836 = vmax.f32 %v831, 0.0
    %v837 = vmax.f32 %v834, 0.0
    %v838 = vperm.slane %v91, 0
    %843 = vrot.lane.b32.xlu0 %v100, 64
    %v844 = vpop.permute.xlu0 %843
    %845 = vrot.lane.b32.xlu0 %v101, 64
    %v846 = vpop.permute.xlu0 %845
    %847 = vrot.lane.b32.xlu0 %v102, 64
    %v848 = vpop.permute.xlu0 %847
    %849 = vrot.lane.b32.xlu0 %v103, 64
    %v850 = vpop.permute.xlu0 %849
    %vm851 = vcmask 523264
    %v853 = vsel %vm851, %v836, 0
    %v856 = vsel %vm851, %v837, 0
    %v858 = vsel %vm851, %v844, 0
    %v860 = vsel %vm851, %v846, 0
    %v862 = vsel %vm851, %v848, 0
    %v864 = vsel %vm851, %v850, 0
    %866 = vmatpush.xpose.msra.mxu0 0.0
    %867 = vmatpush.xpose.msra.mxu0 0.0
    %868 = vmatpush.xpose.msra.mxu0 0.0
    %869 = vmatpush.xpose.msra.mxu0 0.0
    %870 = vmatpush.xpose.msra.mxu0 0.0
    %871 = vmatpush.xpose.msra.mxu0 0.0
    %872 = vmatpush.xpose.msra.mxu0 0.0
    %873 = vmatpush.xpose.msra.mxu0 0.0
    %874 = vmatpush.xpose.msra.mxu0 0.0
    %875 = vmatpush.xpose.msra.mxu0 0.0
    %876 = vmatpush.xpose.msra.mxu0 0.0
    %877 = vmatpush.xpose.msra.mxu0 0.0
    %878 = vmatpush.xpose.msra.mxu0 %v864
    %879 = vmatpush.xpose.msra.mxu0 %v862
    %880 = vmatpush.xpose.msra.mxu0 %v860
    %881 = vmatpush.xpose.msra.mxu0 %v858
    %882 = vmatmul.f32.gmra.mxu0 %v853
    %v883 = vpop.f32.mrf.mxu0
    %v884 = vadd.f32 %v838, %v883
    %885 = vmatmul.f32.gmra.mxu0 %v856
    %v886 = vpop.f32.mrf.mxu0
    %v887 = vadd.f32 %v838, %v886
    %888 = vdwg.mxu0
    %v889 = vadd.f32 %v748, %v884
    %v890 = vadd.f32 %v749, %v887
    %v891 = vsel %vm105, %v889, 0.0
    %892 = vadd.xlane.f32.xlu0 %v891
    %v893 = vpop.xlane.xlu0 %892
    %v894 = vsel %vm105, %v890, 0.0
    %895 = vadd.xlane.f32.xlu0 %v894
    %v896 = vpop.xlane.xlu0 %895
    %v897 = vmul.f32 %v893, %v699
    %v898 = vmul.f32 %v896, %v699
    %v899 = vsub.f32 %v889, %v897
    %v900 = vsub.f32 %v890, %v898
    %v901 = vmul.f32 %v899, %v899
    %v902 = vmul.f32 %v900, %v900
    %v903 = vsel %vm105, %v901, 0.0
    %904 = vadd.xlane.f32.xlu0 %v903
    %v905 = vpop.xlane.xlu0 %904
    %v906 = vsel %vm105, %v902, 0.0
    %907 = vadd.xlane.f32.xlu0 %v906
    %v908 = vpop.xlane.xlu0 %907
    %v909 = vmul.f32 %v905, 0.032258064
    %v910 = vmul.f32 %v908, 0.032258064
    %v911 = vrsqrt.pop %v909
    %v912 = vmul.f32 %v911, %v909
    %v913 = vmul.f32 %v912, %v911
    %v914 = vmul.f32 0.5, %v913
    %v915 = vsub.f32 1.5, %v914
    %v916 = vmul.f32 %v911, %v915
    %v917 = vmul.f32 %v909, %v916
    %vm918 = vcmp.eq.f32.partialorder %v909, inf
    %v919 = vsel %vm918, %v909, %v917
    %vm920 = vcmp.eq.f32.partialorder %v909, 0.0
    %v921 = vand.u32 %v909, 2147483648
    %v922 = vsel %vm920, %v921, %v919
    %v923 = vrsqrt.pop %v910
    %v924 = vmul.f32 %v923, %v910
    %v925 = vmul.f32 %v924, %v923
    %v926 = vmul.f32 0.5, %v925
    %v927 = vsub.f32 1.5, %v926
    %v928 = vmul.f32 %v923, %v927
    %v929 = vmul.f32 %v910, %v928
    %vm930 = vcmp.eq.f32.partialorder %v910, inf
    %v931 = vsel %vm930, %v910, %v929
    %vm932 = vcmp.eq.f32.partialorder %v910, 0.0
    %v933 = vand.u32 %v910, 2147483648
    %v934 = vsel %vm932, %v933, %v931
    %v935 = vadd.f32 %v922, 1e-06
    %v936 = vadd.f32 %v934, 1e-06
    %v937 = vrcp.pop %v935
    %v938 = vrcp.pop %v936
    %v939 = vmul.f32 %v742, %v899
    %v940 = vmul.f32 %v742, %v900
    %v941 = vmul.f32 %v939, %v937
    %v942 = vmul.f32 %v940, %v938
    %v943 = vadd.f32 %v941, %v747
    %v944 = vadd.f32 %v942, %v747
    %945 = vst.msk [vmem:[#allocation10] sm:$0xff] %vm105, %v943
    %946 = vst.msk [vmem:[#allocation10 + $0x8] sm:$0xff] %vm105, %v944
    // Predicated region
    $region34: #{tpu_custom_call.1} parent=1 // pred_check
      _
    $region35: #{tpu_custom_call.1} parent=1 // pred_check_branch
      %948 = sbr.rel (0) target = $region37
    $region36: #{tpu_custom_call.1} parent=1 // pred_region
      %950 = vsyncadd [#allocation4], 0
      %s951 = sshll.u32 [#allocation10], 4
      %s952 = int_to_ptr.vmem [resolvable:$true] %s951
      %s953 = sshll.u32 %s4, 4
      %s954 = int_to_ptr.hbm [resolvable:$true] %s953
      %959 = dma.vmem_to_hbm [thread:$0]  %s952, 256, %s954, [#allocation4], 128, 128, 8
    $region37: #{tpu_custom_call.1} parent=1 // pred_fallthru
      _
    // Predicated region
    $region38: #{tpu_custom_call.1} parent=1 // pred_check
      _
    $region39: #{tpu_custom_call.1} parent=1 // pred_check_branch
      %961 = sbr.rel (0) target = $region41
    $region40: #{tpu_custom_call.1} parent=1 // pred_region
      %963 = vsyncadd [#allocation12], 0
      %s964 = sshll.u32 [#allocation11], 4
      %s965 = int_to_ptr.vmem [resolvable:$true] %s964
      %s966 = sshll.u32 %s5, 4
      %s967 = int_to_ptr.hbm [resolvable:$true] %s966
      %972 = dma.vmem_to_hbm [thread:$0]  %s965, 1024, %s967, [#allocation12], 128, 128, 8
    $region41: #{tpu_custom_call.1} parent=1 // pred_fallthru
      _
    // Predicated region
    $region42: #{tpu_custom_call.1} parent=1 // pred_check
      _
    $region43: #{tpu_custom_call.1} parent=1 // pred_check_branch
      %974 = sbr.rel (0) target = $region45
    $region44: #{tpu_custom_call.1} parent=1 // pred_region
      %976 = dma.done [#allocation4], 256
    $region45: #{tpu_custom_call.1} parent=1 // pred_fallthru
      _
    // Predicated region
    $region46: #{tpu_custom_call.1} parent=1 // pred_check
      _
    $region47: #{tpu_custom_call.1} parent=1 // pred_check_branch
      %978 = sbr.rel (0) target = $region49
    $region48: #{tpu_custom_call.1} parent=1 // pred_region
      %980 = dma.done [#allocation12], 1024
    $region49: #{tpu_custom_call.1} parent=1 // pred_fallthru
      _
    %981 = vsyncpa [#allocation3], 1
    %982 = vsyncpa [#allocation6], 1
    %983 = vsyncpa [#allocation9], 1
    %984 = vsyncpa [#allocation4], 1
    %985 = vsyncpa [#allocation12], 1

</llo_original>
